<compile_context>
chip_gen: v6e
topology: v6e:2x2x1
jax: 0.10.0
libtpu: 0.0.40
codegen_flags: <defaults>
</compile_context>

<pallas_src>
import functools

import jax
import jax.numpy as jnp
from jax.experimental import pallas as pl
from jax.experimental.pallas import tpu as pltpu


def _round_up(x, m):
    return ((x + m - 1) // m) * m


def _choose_block_rows(batch, feat, itemsize):
    """Largest batch tile whose 3 double-buffered input blocks fit an 8 MiB budget."""
    d_eff = _round_up(max(feat, 1), 128)
    budget = 8 * 1024 * 1024
    tb = budget // (3 * 2 * d_eff * itemsize)
    tb = min(tb, 1024, _round_up(batch, 8))
    return max(8, (tb // 8) * 8)


def _triplet_loss_kernel(a_ref, p_ref, n_ref, o_ref, *,
                         margin, inv_temperature, batch, feat, block_rows):
    """One (TB, Dp) batch tile: normalize + cosine sims + margin-ReLU, per-row out."""
    f32 = jnp.float32
    i = pl.program_id(0)

    a = a_ref[...].astype(f32)
    p = p_ref[...].astype(f32)
    n = n_ref[...].astype(f32)
    tb, dp = a.shape

    if dp != feat:
        # D is not a multiple of 128: lanes >= feat of the block are out-of-bounds
        # (undefined) reads; zero them so the reductions below stay exact.
        col_ok = jax.lax.broadcasted_iota(jnp.int32, (tb, dp), 1) < feat
        a = jnp.where(col_ok, a, 0.0)
        p = jnp.where(col_ok, p, 0.0)
        n = jnp.where(col_ok, n, 0.0)

    # Row sums on the MXU: sum_j x[r, j] == (x @ ones)[r, 0].  The elementwise f32
    # product is split into bf16 hi/lo parts (x ~= hi + lo exactly), giving two
    # native bf16 matmuls with f32 accumulation => ~f32-accurate reductions while
    # the XLU stays free.
    ones = jnp.ones((dp, 128), jnp.bfloat16)

    def row_sum(x):
        hi = x.astype(jnp.bfloat16)
        lo = (x - hi.astype(f32)).astype(jnp.bfloat16)
        s = (jnp.dot(hi, ones, preferred_element_type=f32) +
             jnp.dot(lo, ones, preferred_element_type=f32))
        return s[:, :1]                                   # (tb, 1)

    ssa = row_sum(a * a)
    ssp = row_sum(p * p)
    ssn = row_sum(n * n)
    sap = row_sum(a * p)
    san = row_sum(a * n)

    # cos(a, b) = (a.b) * rsqrt(|a|^2 |b|^2); EUP rsqrt instead of sqrt + divide.
    # eps = (1e-12)^2 mirrors F.normalize's per-norm clamp (applied to the product).
    eps = 1e-24
    pos = sap * jax.lax.rsqrt(jnp.maximum(ssa * ssp, eps))
    neg = san * jax.lax.rsqrt(jnp.maximum(ssa * ssn, eps))

    losses = jnp.maximum(margin + (neg - pos) * inv_temperature, 0.0)

    # Ragged last tile: rows >= batch carry undefined data; select them to 0 so the
    # wrapper-side sum is exact.
    row = i * block_rows + jax.lax.broadcasted_iota(jnp.int32, (tb, 1), 0)
    o_ref[...] = jnp.where(row < batch, losses, 0.0)


def contrastive_triplet_loss(anchor, positive, negative, margin=0.5,
                             temperature=0.07, block_rows=None):
    """Scalar triplet loss; anchor/positive/negative: (B, D) embeddings (f32 or bf16)."""
    assert anchor.shape == positive.shape == negative.shape
    assert anchor.ndim == 2
    B, D = anchor.shape

    if block_rows is None:
        TB = _choose_block_rows(B, D, jnp.dtype(anchor.dtype).itemsize)
    else:
        TB = max(8, _round_up(min(int(block_rows), _round_up(B, 8)), 8))
    Dp = _round_up(D, 128)        # lane-aligned block width (block may exceed D)
    G = -(-B // TB)               # number of batch tiles

    kernel = functools.partial(
        _triplet_loss_kernel,
        margin=float(margin),
        inv_temperature=float(1.0 / temperature),
        batch=B,
        feat=D,
        block_rows=TB)

    per_row = pl.pallas_call(
        kernel,
        out_shape=jax.ShapeDtypeStruct((G * TB, 1), jnp.float32),
        grid_spec=pltpu.PrefetchScalarGridSpec(
            num_scalar_prefetch=0,
            grid=(G,),
            in_specs=[
                pl.BlockSpec((TB, Dp), lambda i: (i, 0)),
                pl.BlockSpec((TB, Dp), lambda i: (i, 0)),
                pl.BlockSpec((TB, Dp), lambda i: (i, 0)),
            ],
            out_specs=pl.BlockSpec((TB, 1), lambda i: (i, 0)),
        ),
        compiler_params=pltpu.CompilerParams(
            dimension_semantics=("parallel",),
            vmem_limit_bytes=32 * 1024 * 1024),
    )(anchor, positive, negative)

    # Tiny final reduction (B * 4 bytes) — kept outside so the grid axis can be
    # "parallel" (both TensorCores on v7x) with no shared accumulator.
    return jnp.sum(per_row) * (1.0 / B)


def _reference_loss(anchor, positive, negative, margin=0.5, temperature=0.07):
    """Pure-JAX reference mirroring the PyTorch module."""
    def normalize(x):
        nrm = jnp.sqrt(jnp.sum(x * x, axis=1, keepdims=True))
        return x / jnp.maximum(nrm, 1e-12)
    a, p, n = normalize(anchor), normalize(positive), normalize(negative)
    pos = jnp.sum(a * p, axis=1) / temperature
    neg = jnp.sum(a * n, axis=1) / temperature
    return jnp.mean(jnp.maximum(margin - pos + neg, 0.0))


def _close(x, y, atol=2e-3, rtol=2e-3):
    return bool(jnp.abs(x - y) <= atol + rtol * jnp.abs(y))


if __name__ == "__main__":
    key = jax.random.PRNGKey(0)
    ks = jax.random.split(key, 12)

    # Embeddings as produced by the upstream projection head (projection_dim=128).
    B, D = 8, 128
    anchor = jax.random.normal(ks[0], (B, D), jnp.float32)
    positive = jax.random.normal(ks[1], (B, D), jnp.float32)
    negative = jax.random.normal(ks[2], (B, D), jnp.float32)

    loss = jax.jit(contrastive_triplet_loss)(anchor, positive, negative)
    jax.block_until_ready(loss)
    ref = _reference_loss(anchor, positive, negative)
    assert loss.shape == () and loss.dtype == jnp.float32
    assert bool(jnp.isfinite(loss))
    assert _close(loss, ref), (float(loss), float(ref))

    # Unaligned D and ragged batch: exercises the lane mask + row mask (no padding).
    a2 = jax.random.normal(ks[3], (5, 96), jnp.float32)
    p2 = jax.random.normal(ks[4], (5, 96), jnp.float32)
    n2 = jax.random.normal(ks[5], (5, 96), jnp.float32)
    l2 = contrastive_triplet_loss(a2, p2, n2, margin=0.3, temperature=0.1)
    r2 = _reference_loss(a2, p2, n2, margin=0.3, temperature=0.1)
    jax.block_until_ready(l2)
    assert _close(l2, r2), (float(l2), float(r2))

    # Multi-tile "parallel" grid with a ragged last tile (per-tile partial outputs).
    a3 = jax.random.normal(ks[6], (20, 128), jnp.float32)
    p3 = jax.random.normal(ks[7], (20, 128), jnp.float32)
    n3 = jax.random.normal(ks[8], (20, 128), jnp.float32)
    l3 = contrastive_triplet_loss(a3, p3, n3, block_rows=8)
    r3 = _reference_loss(a3, p3, n3)
    jax.block_until_ready(l3)
    assert _close(l3, r3), (float(l3), float(r3))

    # bf16 embeddings straight from HBM (no wrapper cast/copy); compare against the
    # reference evaluated on the same bf16-rounded values.
    a4 = jax.random.normal(ks[9], (16, 128), jnp.bfloat16)
    p4 = jax.random.normal(ks[10], (16, 128), jnp.bfloat16)
    n4 = jax.random.normal(ks[11], (16, 128), jnp.bfloat16)
    l4 = contrastive_triplet_loss(a4, p4, n4)
    r4 = _reference_loss(a4.astype(jnp.float32), p4.astype(jnp.float32),
                         n4.astype(jnp.float32))
    jax.block_until_ready(l4)
    assert _close(l4, r4), (float(l4), float(r4))

    print("KERNEL_OK")
</pallas_src>

<mosaic_0001>
module attributes {stable_mosaic.version = 11 : i64} {
  func.func @_triplet_loss_kernel(%arg0: i32, %arg1: memref<8x128xf32, #tpu.memory_space<vmem>>, %arg2: memref<8x128xf32, #tpu.memory_space<vmem>>, %arg3: memref<8x128xf32, #tpu.memory_space<vmem>>, %arg4: memref<8x1xf32, #tpu.memory_space<vmem>>) attributes {dimension_semantics = [#tpu.dimension_semantics<parallel>], iteration_bounds = array<i64: 1>, scalar_prefetch = 0 : i64, scratch_operands = 0 : i64, tpu.core_type = #tpu.core_type<tc>, window_params = [{transform_indices = @transform_0, window_bounds = array<i64: 8, 128>}, {transform_indices = @transform_1, window_bounds = array<i64: 8, 128>}, {transform_indices = @transform_2, window_bounds = array<i64: 8, 128>}, {transform_indices = @transform_3, window_bounds = array<i64: 8, 1>}]} {
    %c0 = arith.constant 0 : index
    %c0_0 = arith.constant 0 : index
    %0 = vector.load %arg1[%c0, %c0_0] : memref<8x128xf32, #tpu.memory_space<vmem>>, vector<8x128xf32>
    %c0_1 = arith.constant 0 : index
    %c0_2 = arith.constant 0 : index
    %1 = vector.load %arg2[%c0_1, %c0_2] : memref<8x128xf32, #tpu.memory_space<vmem>>, vector<8x128xf32>
    %c0_3 = arith.constant 0 : index
    %c0_4 = arith.constant 0 : index
    %2 = vector.load %arg3[%c0_3, %c0_4] : memref<8x128xf32, #tpu.memory_space<vmem>>, vector<8x128xf32>
    %cst = arith.constant 1.000000e+00 : bf16
    %3 = vector.broadcast %cst : bf16 to vector<128x128xbf16>
    %4 = arith.mulf %0, %0 : vector<8x128xf32>
    %5 = arith.truncf %4 : vector<8x128xf32> to vector<8x128xbf16>
    %6 = arith.extf %5 : vector<8x128xbf16> to vector<8x128xf32>
    %7 = arith.subf %4, %6 : vector<8x128xf32>
    %8 = arith.truncf %7 : vector<8x128xf32> to vector<8x128xbf16>
    %cst_5 = arith.constant dense<0.000000e+00> : vector<8x128xf32>
    %9 = tpu.matmul %5, %3, %cst_5 {dimension_numbers = #tpu.dot_dimension_numbers<[1], [0], [0], [1], [0, 0, 1, 1], [], []>} : vector<8x128xbf16>, vector<128x128xbf16>, vector<8x128xf32> -> vector<8x128xf32>
    %cst_6 = arith.constant dense<0.000000e+00> : vector<8x128xf32>
    %10 = tpu.matmul %8, %3, %cst_6 {dimension_numbers = #tpu.dot_dimension_numbers<[1], [0], [0], [1], [0, 0, 1, 1], [], []>} : vector<8x128xbf16>, vector<128x128xbf16>, vector<8x128xf32> -> vector<8x128xf32>
    %11 = arith.addf %9, %10 : vector<8x128xf32>
    %12 = vector.extract_strided_slice %11 {offsets = [0, 0], sizes = [8, 1], strides = [1, 1]} : vector<8x128xf32> to vector<8x1xf32>
    %13 = arith.mulf %1, %1 : vector<8x128xf32>
    %14 = arith.truncf %13 : vector<8x128xf32> to vector<8x128xbf16>
    %15 = arith.extf %14 : vector<8x128xbf16> to vector<8x128xf32>
    %16 = arith.subf %13, %15 : vector<8x128xf32>
    %17 = arith.truncf %16 : vector<8x128xf32> to vector<8x128xbf16>
    %cst_7 = arith.constant dense<0.000000e+00> : vector<8x128xf32>
    %18 = tpu.matmul %14, %3, %cst_7 {dimension_numbers = #tpu.dot_dimension_numbers<[1], [0], [0], [1], [0, 0, 1, 1], [], []>} : vector<8x128xbf16>, vector<128x128xbf16>, vector<8x128xf32> -> vector<8x128xf32>
    %cst_8 = arith.constant dense<0.000000e+00> : vector<8x128xf32>
    %19 = tpu.matmul %17, %3, %cst_8 {dimension_numbers = #tpu.dot_dimension_numbers<[1], [0], [0], [1], [0, 0, 1, 1], [], []>} : vector<8x128xbf16>, vector<128x128xbf16>, vector<8x128xf32> -> vector<8x128xf32>
    %20 = arith.addf %18, %19 : vector<8x128xf32>
    %21 = vector.extract_strided_slice %20 {offsets = [0, 0], sizes = [8, 1], strides = [1, 1]} : vector<8x128xf32> to vector<8x1xf32>
    %22 = arith.mulf %2, %2 : vector<8x128xf32>
    %23 = arith.truncf %22 : vector<8x128xf32> to vector<8x128xbf16>
    %24 = arith.extf %23 : vector<8x128xbf16> to vector<8x128xf32>
    %25 = arith.subf %22, %24 : vector<8x128xf32>
    %26 = arith.truncf %25 : vector<8x128xf32> to vector<8x128xbf16>
    %cst_9 = arith.constant dense<0.000000e+00> : vector<8x128xf32>
    %27 = tpu.matmul %23, %3, %cst_9 {dimension_numbers = #tpu.dot_dimension_numbers<[1], [0], [0], [1], [0, 0, 1, 1], [], []>} : vector<8x128xbf16>, vector<128x128xbf16>, vector<8x128xf32> -> vector<8x128xf32>
    %cst_10 = arith.constant dense<0.000000e+00> : vector<8x128xf32>
    %28 = tpu.matmul %26, %3, %cst_10 {dimension_numbers = #tpu.dot_dimension_numbers<[1], [0], [0], [1], [0, 0, 1, 1], [], []>} : vector<8x128xbf16>, vector<128x128xbf16>, vector<8x128xf32> -> vector<8x128xf32>
    %29 = arith.addf %27, %28 : vector<8x128xf32>
    %30 = vector.extract_strided_slice %29 {offsets = [0, 0], sizes = [8, 1], strides = [1, 1]} : vector<8x128xf32> to vector<8x1xf32>
    %31 = arith.mulf %0, %1 : vector<8x128xf32>
    %32 = arith.truncf %31 : vector<8x128xf32> to vector<8x128xbf16>
    %33 = arith.extf %32 : vector<8x128xbf16> to vector<8x128xf32>
    %34 = arith.subf %31, %33 : vector<8x128xf32>
    %35 = arith.truncf %34 : vector<8x128xf32> to vector<8x128xbf16>
    %cst_11 = arith.constant dense<0.000000e+00> : vector<8x128xf32>
    %36 = tpu.matmul %32, %3, %cst_11 {dimension_numbers = #tpu.dot_dimension_numbers<[1], [0], [0], [1], [0, 0, 1, 1], [], []>} : vector<8x128xbf16>, vector<128x128xbf16>, vector<8x128xf32> -> vector<8x128xf32>
    %cst_12 = arith.constant dense<0.000000e+00> : vector<8x128xf32>
    %37 = tpu.matmul %35, %3, %cst_12 {dimension_numbers = #tpu.dot_dimension_numbers<[1], [0], [0], [1], [0, 0, 1, 1], [], []>} : vector<8x128xbf16>, vector<128x128xbf16>, vector<8x128xf32> -> vector<8x128xf32>
    %38 = arith.addf %36, %37 : vector<8x128xf32>
    %39 = vector.extract_strided_slice %38 {offsets = [0, 0], sizes = [8, 1], strides = [1, 1]} : vector<8x128xf32> to vector<8x1xf32>
    %40 = arith.mulf %0, %2 : vector<8x128xf32>
    %41 = arith.truncf %40 : vector<8x128xf32> to vector<8x128xbf16>
    %42 = arith.extf %41 : vector<8x128xbf16> to vector<8x128xf32>
    %43 = arith.subf %40, %42 : vector<8x128xf32>
    %44 = arith.truncf %43 : vector<8x128xf32> to vector<8x128xbf16>
    %cst_13 = arith.constant dense<0.000000e+00> : vector<8x128xf32>
    %45 = tpu.matmul %41, %3, %cst_13 {dimension_numbers = #tpu.dot_dimension_numbers<[1], [0], [0], [1], [0, 0, 1, 1], [], []>} : vector<8x128xbf16>, vector<128x128xbf16>, vector<8x128xf32> -> vector<8x128xf32>
    %cst_14 = arith.constant dense<0.000000e+00> : vector<8x128xf32>
    %46 = tpu.matmul %44, %3, %cst_14 {dimension_numbers = #tpu.dot_dimension_numbers<[1], [0], [0], [1], [0, 0, 1, 1], [], []>} : vector<8x128xbf16>, vector<128x128xbf16>, vector<8x128xf32> -> vector<8x128xf32>
    %47 = arith.addf %45, %46 : vector<8x128xf32>
    %48 = vector.extract_strided_slice %47 {offsets = [0, 0], sizes = [8, 1], strides = [1, 1]} : vector<8x128xf32> to vector<8x1xf32>
    %49 = arith.mulf %12, %21 : vector<8x1xf32>
    %cst_15 = arith.constant 1.000000e-24 : f32
    %50 = vector.broadcast %cst_15 : f32 to vector<8x1xf32>
    %51 = arith.maximumf %49, %50 : vector<8x1xf32>
    %52 = math.rsqrt %51 : vector<8x1xf32>
    %53 = arith.mulf %39, %52 : vector<8x1xf32>
    %54 = arith.mulf %12, %30 : vector<8x1xf32>
    %cst_16 = arith.constant 1.000000e-24 : f32
    %55 = vector.broadcast %cst_16 : f32 to vector<8x1xf32>
    %56 = arith.maximumf %54, %55 : vector<8x1xf32>
    %57 = math.rsqrt %56 : vector<8x1xf32>
    %58 = arith.mulf %48, %57 : vector<8x1xf32>
    %59 = arith.subf %58, %53 : vector<8x1xf32>
    %cst_17 = arith.constant 14.2857141 : f32
    %60 = vector.broadcast %cst_17 : f32 to vector<8x1xf32>
    %61 = arith.mulf %59, %60 : vector<8x1xf32>
    %cst_18 = arith.constant 5.000000e-01 : f32
    %62 = vector.broadcast %cst_18 : f32 to vector<8x1xf32>
    %63 = arith.addf %62, %61 : vector<8x1xf32>
    %cst_19 = arith.constant 0.000000e+00 : f32
    %64 = vector.broadcast %cst_19 : f32 to vector<8x1xf32>
    %65 = arith.maximumf %63, %64 : vector<8x1xf32>
    %c8_i32 = arith.constant 8 : i32
    %66 = arith.muli %arg0, %c8_i32 : i32
    %67 = tpu.iota {dimensions = array<i32: 0>} : vector<8x1xi32>
    %68 = vector.broadcast %66 : i32 to vector<8x1xi32>
    %69 = arith.addi %68, %67 : vector<8x1xi32>
    %c8_i32_20 = arith.constant 8 : i32
    %70 = vector.broadcast %c8_i32_20 : i32 to vector<8x1xi32>
    %71 = arith.cmpi slt, %69, %70 : vector<8x1xi32>
    %cst_21 = arith.constant 0.000000e+00 : f32
    %72 = vector.broadcast %cst_21 : f32 to vector<8x1xf32>
    %73 = arith.select %71, %65, %72 : vector<8x1xi1>, vector<8x1xf32>
    %c0_22 = arith.constant 0 : index
    %c0_23 = arith.constant 0 : index
    %74 = vector.load %arg4[%c0_22, %c0_23] : memref<8x1xf32, #tpu.memory_space<vmem>>, vector<8x1xf32>
    tpu.vector_store %arg4[%c0_22, %c0_23], %73 {strides = array<i32>} : memref<8x1xf32, #tpu.memory_space<vmem>>, vector<8x1xf32>,
    return
  }
  func.func @transform_0(%arg0: i32) -> (i32, i32) {
    %c0_i32 = arith.constant 0 : i32
    %c0_i32_0 = arith.constant 0 : i32
    return %arg0, %c0_i32 : i32, i32
  }
  func.func @transform_1(%arg0: i32) -> (i32, i32) {
    %c0_i32 = arith.constant 0 : i32
    %c0_i32_0 = arith.constant 0 : i32
    return %arg0, %c0_i32 : i32, i32
  }
  func.func @transform_2(%arg0: i32) -> (i32, i32) {
    %c0_i32 = arith.constant 0 : i32
    %c0_i32_0 = arith.constant 0 : i32
    return %arg0, %c0_i32 : i32, i32
  }
  func.func @transform_3(%arg0: i32) -> (i32, i32) {
    %c0_i32 = arith.constant 0 : i32
    %c0_i32_0 = arith.constant 0 : i32
    return %arg0, %c0_i32 : i32, i32
  }
}

</mosaic_0001>

<llo_original>
// kernel: contrastive_triplet_loss.1
$region0: #{contrastive_triplet_loss.1}
  #allocation0 [shape = 'u32[]', space=smem, size = 0x4, offset = 0x4, fixed_abs, tag = 'smem constant byte address 0x4 - core index']
  #allocation1 [shape = 'u32[144,128]{1,0:T(1,128)}', space=vmem, size = 0x12000, scoped, tag = 'internal scratch']
  %s0 = inlined_call_operand.hbm [shape: f32[8,128], index: 0, kind: input, shape index: {}]
  %s1 = inlined_call_operand.hbm [shape: f32[8,128], index: 1, kind: input, shape index: {}]
  %s2 = inlined_call_operand.hbm [shape: f32[8,128], index: 2, kind: input, shape index: {}]
  %s3 = inlined_call_operand.vmem [shape: f32[8,1], index: 3, kind: output, shape index: {}]
  %s4 = sld [smem:[#allocation0]]
  $region34: #{contrastive_triplet_loss.1} parent=0
    _
  %s6 = ssub.s32 1, %s4
  %s7 = scalar_select 0, %s6, %s4
  $region1: #{contrastive_triplet_loss.1} parent=0
    #allocation2 [shape = 'u8[4096]{0}', space=vmem, size = 0x1000, scoped, tag = 'input window, operand 0, single buffered']
    #allocation3 [shape = 's32[1]{0}', space=sflag, size = 0x4, scoped, tag = 'scoped memory for contrastive_triplet_loss.1']
    #allocation4 [shape = 'u8[4096]{0}', space=vmem, size = 0x1000, scoped, tag = 'input window, operand 1, single buffered']
    #allocation5 [shape = 's32[1]{0}', space=sflag, size = 0x4, scoped, tag = 'scoped memory for contrastive_triplet_loss.1']
    #allocation6 [shape = 'u8[4096]{0}', space=vmem, size = 0x1000, scoped, tag = 'input window, operand 2, single buffered']
    %8 = vsyncpa [#allocation3], 0
    %9 = vsyncpa [#allocation5], 0
    // Predicated region
    $region2: #{contrastive_triplet_loss.1} parent=1 // pred_check
      _
    $region3: #{contrastive_triplet_loss.1} parent=1 // pred_check_branch
      %11 = sbr.rel (0) target = $region5
    $region4: #{contrastive_triplet_loss.1} parent=1 // pred_region
      %s13 = ssub.s32 128, 128
      %14 = vsyncadd [#allocation3], %s13
      %s16 = sshll.u32 [#allocation2], 4
      %s17 = int_to_ptr.vmem [resolvable:$true] %s16
      %19 = dma.hbm_to_vmem [thread:$0]  %s0, 128, %s17, [#allocation3]
    $region5: #{contrastive_triplet_loss.1} parent=1 // pred_fallthru
      _
    // Predicated region
    $region6: #{contrastive_triplet_loss.1} parent=1 // pred_check
      _
    $region7: #{contrastive_triplet_loss.1} parent=1 // pred_check_branch
      %21 = sbr.rel (0) target = $region9
    $region8: #{contrastive_triplet_loss.1} parent=1 // pred_region
      %s23 = ssub.s32 128, 128
      %24 = vsyncadd [#allocation5], %s23
      %s26 = sshll.u32 [#allocation4], 4
      %s27 = int_to_ptr.vmem [resolvable:$true] %s26
      %29 = dma.hbm_to_vmem [thread:$0]  %s1, 128, %s27, [#allocation5]
    $region9: #{contrastive_triplet_loss.1} parent=1 // pred_fallthru
      _
    // Predicated region
    $region10: #{contrastive_triplet_loss.1} parent=1 // pred_check
      _
    $region11: #{contrastive_triplet_loss.1} parent=1 // pred_check_branch
      %31 = sbr.rel (0) target = $region13
    $region12: #{contrastive_triplet_loss.1} parent=1 // pred_region
      %s33 = ssub.s32 128, 128
      %34 = vsyncadd [#allocation5], %s33
      %s36 = sshll.u32 [#allocation6], 4
      %s37 = int_to_ptr.vmem [resolvable:$true] %s36
      %39 = dma.hbm_to_vmem [thread:$0]  %s2, 128, %s37, [#allocation5]
    $region13: #{contrastive_triplet_loss.1} parent=1 // pred_fallthru
      _
    // Predicated region
    $region14: #{contrastive_triplet_loss.1} parent=1 // pred_check
      _
    $region15: #{contrastive_triplet_loss.1} parent=1 // pred_check_branch
      %41 = sbr.rel (0) target = $region17
    $region16: #{contrastive_triplet_loss.1} parent=1 // pred_region
      %42 = dma.done [#allocation3], 128
    $region17: #{contrastive_triplet_loss.1} parent=1 // pred_fallthru
      _
    // Predicated region
    $region18: #{contrastive_triplet_loss.1} parent=1 // pred_check
      _
    $region19: #{contrastive_triplet_loss.1} parent=1 // pred_check_branch
      %44 = sbr.rel (0) target = $region21
    $region20: #{contrastive_triplet_loss.1} parent=1 // pred_region
      %45 = dma.done [#allocation5], 128
    $region21: #{contrastive_triplet_loss.1} parent=1 // pred_fallthru
      _
    // Predicated region
    $region22: #{contrastive_triplet_loss.1} parent=1 // pred_check
      _
    $region23: #{contrastive_triplet_loss.1} parent=1 // pred_check_branch
      %47 = sbr.rel (0) target = $region25
    $region24: #{contrastive_triplet_loss.1} parent=1 // pred_region
      %48 = dma.done [#allocation5], 128
    $region25: #{contrastive_triplet_loss.1} parent=1 // pred_fallthru
      _
    %v51 = vld [vmem:[#allocation2] sm:$0xff]
    %v52 = vld [vmem:[#allocation4] sm:$0xff]
    %v53 = vld [vmem:[#allocation6] sm:$0xff]
    %v54 = vmul.f32 %v51, %v51
    %v55 = vpack.c.bf16 %v54, %v54
    %v56 = vunpack.c.l.bf16 %v55
    %v57 = vsub.f32 %v54, %v56
    %v58 = vpack.c.bf16 %v57, %v57
    %59 = vmatprep.subr.bf16.mxu0 0
    %60 = vmatpush1.bf16.msra.mxu0 1065369472
    %61 = vmatprep.subr.bf16.mxu0 0
    %62 = vmatpush1.bf16.msra.mxu0 1065369472
    %63 = vmatprep.subr.bf16.mxu0 0
    %64 = vmatpush1.bf16.msra.mxu0 1065369472
    %65 = vmatprep.subr.bf16.mxu0 0
    %66 = vmatpush1.bf16.msra.mxu0 1065369472
    %67 = vmatprep.subr.bf16.mxu0 0
    %68 = vmatpush1.bf16.msra.mxu0 1065369472
    %69 = vmatprep.subr.bf16.mxu0 0
    %70 = vmatpush1.bf16.msra.mxu0 1065369472
    %71 = vmatprep.subr.bf16.mxu0 0
    %72 = vmatpush1.bf16.msra.mxu0 1065369472
    %73 = vmatprep.subr.bf16.mxu0 0
    %74 = vmatpush1.bf16.msra.mxu0 1065369472
    %75 = vmatprep.subr.bf16.mxu0 0
    %76 = vmatpush2.bf16.msra.mxu0 0
    %77 = vmatprep.subr.bf16.mxu0 0
    %78 = vmatpush2.bf16.msra.mxu0 0
    %79 = vmatprep.subr.bf16.mxu0 0
    %80 = vmatpush2.bf16.msra.mxu0 0
    %81 = vmatprep.subr.bf16.mxu0 0
    %82 = vmatpush2.bf16.msra.mxu0 0
    %83 = vmatprep.subr.bf16.mxu0 0
    %84 = vmatpush2.bf16.msra.mxu0 0
    %85 = vmatprep.subr.bf16.mxu0 0
    %86 = vmatpush2.bf16.msra.mxu0 0
    %87 = vmatprep.subr.bf16.mxu0 0
    %88 = vmatpush2.bf16.msra.mxu0 0
    %89 = vmatprep.subr.bf16.mxu0 0
    %90 = vmatpush2.bf16.msra.mxu0 0
    %91 = vmatprep.mubr.bf16.mxu0 0
    %92 = vmatmul.mubr.bf16.gmra.mxu0 %v58
    %v93 = vpop.f32.mrf.mxu0
    %v94 = vadd.f32 0.0, %v93
    %v95 = vpop.f32.mrf.mxu0
    %v96 = vpop.f32.mrf.mxu0
    %v97 = vpop.f32.mrf.mxu0
    %98 = vdwg.mxu0
    %99 = vmatprep.subr.bf16.mxu0 0
    %100 = vmatpush1.bf16.msra.mxu0 1065369472
    %101 = vmatprep.subr.bf16.mxu0 0
    %102 = vmatpush1.bf16.msra.mxu0 1065369472
    %103 = vmatprep.subr.bf16.mxu0 0
    %104 = vmatpush1.bf16.msra.mxu0 1065369472
    %105 = vmatprep.subr.bf16.mxu0 0
    %106 = vmatpush1.bf16.msra.mxu0 1065369472
    %107 = vmatprep.subr.bf16.mxu0 0
    %108 = vmatpush1.bf16.msra.mxu0 1065369472
    %109 = vmatprep.subr.bf16.mxu0 0
    %110 = vmatpush1.bf16.msra.mxu0 1065369472
    %111 = vmatprep.subr.bf16.mxu0 0
    %112 = vmatpush1.bf16.msra.mxu0 1065369472
    %113 = vmatprep.subr.bf16.mxu0 0
    %114 = vmatpush1.bf16.msra.mxu0 1065369472
    %115 = vmatprep.subr.bf16.mxu0 0
    %116 = vmatpush2.bf16.msra.mxu0 0
    %117 = vmatprep.subr.bf16.mxu0 0
    %118 = vmatpush2.bf16.msra.mxu0 0
    %119 = vmatprep.subr.bf16.mxu0 0
    %120 = vmatpush2.bf16.msra.mxu0 0
    %121 = vmatprep.subr.bf16.mxu0 0
    %122 = vmatpush2.bf16.msra.mxu0 0
    %123 = vmatprep.subr.bf16.mxu0 0
    %124 = vmatpush2.bf16.msra.mxu0 0
    %125 = vmatprep.subr.bf16.mxu0 0
    %126 = vmatpush2.bf16.msra.mxu0 0
    %127 = vmatprep.subr.bf16.mxu0 0
    %128 = vmatpush2.bf16.msra.mxu0 0
    %129 = vmatprep.subr.bf16.mxu0 0
    %130 = vmatpush2.bf16.msra.mxu0 0
    %131 = vmatprep.mubr.bf16.mxu0 0
    %132 = vmatmul.mubr.bf16.gmra.mxu0 %v55
    %v133 = vpop.f32.mrf.mxu0
    %v134 = vadd.f32 %v94, %v133
    %v135 = vpop.f32.mrf.mxu0
    %v136 = vpop.f32.mrf.mxu0
    %v137 = vpop.f32.mrf.mxu0
    %138 = vdwg.mxu0
    %v139 = vmul.f32 %v52, %v52
    %v140 = vpack.c.bf16 %v139, %v139
    %v141 = vunpack.c.l.bf16 %v140
    %v142 = vsub.f32 %v139, %v141
    %v143 = vpack.c.bf16 %v142, %v142
    %144 = vmatprep.subr.bf16.mxu0 0
    %145 = vmatpush1.bf16.msra.mxu0 1065369472
    %146 = vmatprep.subr.bf16.mxu0 0
    %147 = vmatpush1.bf16.msra.mxu0 1065369472
    %148 = vmatprep.subr.bf16.mxu0 0
    %149 = vmatpush1.bf16.msra.mxu0 1065369472
    %150 = vmatprep.subr.bf16.mxu0 0
    %151 = vmatpush1.bf16.msra.mxu0 1065369472
    %152 = vmatprep.subr.bf16.mxu0 0
    %153 = vmatpush1.bf16.msra.mxu0 1065369472
    %154 = vmatprep.subr.bf16.mxu0 0
    %155 = vmatpush1.bf16.msra.mxu0 1065369472
    %156 = vmatprep.subr.bf16.mxu0 0
    %157 = vmatpush1.bf16.msra.mxu0 1065369472
    %158 = vmatprep.subr.bf16.mxu0 0
    %159 = vmatpush1.bf16.msra.mxu0 1065369472
    %160 = vmatprep.subr.bf16.mxu0 0
    %161 = vmatpush2.bf16.msra.mxu0 0
    %162 = vmatprep.subr.bf16.mxu0 0
    %163 = vmatpush2.bf16.msra.mxu0 0
    %164 = vmatprep.subr.bf16.mxu0 0
    %165 = vmatpush2.bf16.msra.mxu0 0
    %166 = vmatprep.subr.bf16.mxu0 0
    %167 = vmatpush2.bf16.msra.mxu0 0
    %168 = vmatprep.subr.bf16.mxu0 0
    %169 = vmatpush2.bf16.msra.mxu0 0
    %170 = vmatprep.subr.bf16.mxu0 0
    %171 = vmatpush2.bf16.msra.mxu0 0
    %172 = vmatprep.subr.bf16.mxu0 0
    %173 = vmatpush2.bf16.msra.mxu0 0
    %174 = vmatprep.subr.bf16.mxu0 0
    %175 = vmatpush2.bf16.msra.mxu0 0
    %176 = vmatprep.mubr.bf16.mxu0 0
    %177 = vmatmul.mubr.bf16.gmra.mxu0 %v143
    %v178 = vpop.f32.mrf.mxu0
    %v179 = vadd.f32 0.0, %v178
    %v180 = vpop.f32.mrf.mxu0
    %v181 = vpop.f32.mrf.mxu0
    %v182 = vpop.f32.mrf.mxu0
    %183 = vdwg.mxu0
    %184 = vmatprep.subr.bf16.mxu0 0
    %185 = vmatpush1.bf16.msra.mxu0 1065369472
    %186 = vmatprep.subr.bf16.mxu0 0
    %187 = vmatpush1.bf16.msra.mxu0 1065369472
    %188 = vmatprep.subr.bf16.mxu0 0
    %189 = vmatpush1.bf16.msra.mxu0 1065369472
    %190 = vmatprep.subr.bf16.mxu0 0
    %191 = vmatpush1.bf16.msra.mxu0 1065369472
    %192 = vmatprep.subr.bf16.mxu0 0
    %193 = vmatpush1.bf16.msra.mxu0 1065369472
    %194 = vmatprep.subr.bf16.mxu0 0
    %195 = vmatpush1.bf16.msra.mxu0 1065369472
    %196 = vmatprep.subr.bf16.mxu0 0
    %197 = vmatpush1.bf16.msra.mxu0 1065369472
    %198 = vmatprep.subr.bf16.mxu0 0
    %199 = vmatpush1.bf16.msra.mxu0 1065369472
    %200 = vmatprep.subr.bf16.mxu0 0
    %201 = vmatpush2.bf16.msra.mxu0 0
    %202 = vmatprep.subr.bf16.mxu0 0
    %203 = vmatpush2.bf16.msra.mxu0 0
    %204 = vmatprep.subr.bf16.mxu0 0
    %205 = vmatpush2.bf16.msra.mxu0 0
    %206 = vmatprep.subr.bf16.mxu0 0
    %207 = vmatpush2.bf16.msra.mxu0 0
    %208 = vmatprep.subr.bf16.mxu0 0
    %209 = vmatpush2.bf16.msra.mxu0 0
    %210 = vmatprep.subr.bf16.mxu0 0
    %211 = vmatpush2.bf16.msra.mxu0 0
    %212 = vmatprep.subr.bf16.mxu0 0
    %213 = vmatpush2.bf16.msra.mxu0 0
    %214 = vmatprep.subr.bf16.mxu0 0
    %215 = vmatpush2.bf16.msra.mxu0 0
    %216 = vmatprep.mubr.bf16.mxu0 0
    %217 = vmatmul.mubr.bf16.gmra.mxu0 %v140
    %v218 = vpop.f32.mrf.mxu0
    %v219 = vadd.f32 %v179, %v218
    %v220 = vpop.f32.mrf.mxu0
    %v221 = vpop.f32.mrf.mxu0
    %v222 = vpop.f32.mrf.mxu0
    %223 = vdwg.mxu0
    %v224 = vmul.f32 %v53, %v53
    %v225 = vpack.c.bf16 %v224, %v224
    %v226 = vunpack.c.l.bf16 %v225
    %v227 = vsub.f32 %v224, %v226
    %v228 = vpack.c.bf16 %v227, %v227
    %229 = vmatprep.subr.bf16.mxu0 0
    %230 = vmatpush1.bf16.msra.mxu0 1065369472
    %231 = vmatprep.subr.bf16.mxu0 0
    %232 = vmatpush1.bf16.msra.mxu0 1065369472
    %233 = vmatprep.subr.bf16.mxu0 0
    %234 = vmatpush1.bf16.msra.mxu0 1065369472
    %235 = vmatprep.subr.bf16.mxu0 0
    %236 = vmatpush1.bf16.msra.mxu0 1065369472
    %237 = vmatprep.subr.bf16.mxu0 0
    %238 = vmatpush1.bf16.msra.mxu0 1065369472
    %239 = vmatprep.subr.bf16.mxu0 0
    %240 = vmatpush1.bf16.msra.mxu0 1065369472
    %241 = vmatprep.subr.bf16.mxu0 0
    %242 = vmatpush1.bf16.msra.mxu0 1065369472
    %243 = vmatprep.subr.bf16.mxu0 0
    %244 = vmatpush1.bf16.msra.mxu0 1065369472
    %245 = vmatprep.subr.bf16.mxu0 0
    %246 = vmatpush2.bf16.msra.mxu0 0
    %247 = vmatprep.subr.bf16.mxu0 0
    %248 = vmatpush2.bf16.msra.mxu0 0
    %249 = vmatprep.subr.bf16.mxu0 0
    %250 = vmatpush2.bf16.msra.mxu0 0
    %251 = vmatprep.subr.bf16.mxu0 0
    %252 = vmatpush2.bf16.msra.mxu0 0
    %253 = vmatprep.subr.bf16.mxu0 0
    %254 = vmatpush2.bf16.msra.mxu0 0
    %255 = vmatprep.subr.bf16.mxu0 0
    %256 = vmatpush2.bf16.msra.mxu0 0
    %257 = vmatprep.subr.bf16.mxu0 0
    %258 = vmatpush2.bf16.msra.mxu0 0
    %259 = vmatprep.subr.bf16.mxu0 0
    %260 = vmatpush2.bf16.msra.mxu0 0
    %261 = vmatprep.mubr.bf16.mxu0 0
    %262 = vmatmul.mubr.bf16.gmra.mxu0 %v228
    %v263 = vpop.f32.mrf.mxu0
    %v264 = vadd.f32 0.0, %v263
    %v265 = vpop.f32.mrf.mxu0
    %v266 = vpop.f32.mrf.mxu0
    %v267 = vpop.f32.mrf.mxu0
    %268 = vdwg.mxu0
    %269 = vmatprep.subr.bf16.mxu0 0
    %270 = vmatpush1.bf16.msra.mxu0 1065369472
    %271 = vmatprep.subr.bf16.mxu0 0
    %272 = vmatpush1.bf16.msra.mxu0 1065369472
    %273 = vmatprep.subr.bf16.mxu0 0
    %274 = vmatpush1.bf16.msra.mxu0 1065369472
    %275 = vmatprep.subr.bf16.mxu0 0
    %276 = vmatpush1.bf16.msra.mxu0 1065369472
    %277 = vmatprep.subr.bf16.mxu0 0
    %278 = vmatpush1.bf16.msra.mxu0 1065369472
    %279 = vmatprep.subr.bf16.mxu0 0
    %280 = vmatpush1.bf16.msra.mxu0 1065369472
    %281 = vmatprep.subr.bf16.mxu0 0
    %282 = vmatpush1.bf16.msra.mxu0 1065369472
    %283 = vmatprep.subr.bf16.mxu0 0
    %284 = vmatpush1.bf16.msra.mxu0 1065369472
    %285 = vmatprep.subr.bf16.mxu0 0
    %286 = vmatpush2.bf16.msra.mxu0 0
    %287 = vmatprep.subr.bf16.mxu0 0
    %288 = vmatpush2.bf16.msra.mxu0 0
    %289 = vmatprep.subr.bf16.mxu0 0
    %290 = vmatpush2.bf16.msra.mxu0 0
    %291 = vmatprep.subr.bf16.mxu0 0
    %292 = vmatpush2.bf16.msra.mxu0 0
    %293 = vmatprep.subr.bf16.mxu0 0
    %294 = vmatpush2.bf16.msra.mxu0 0
    %295 = vmatprep.subr.bf16.mxu0 0
    %296 = vmatpush2.bf16.msra.mxu0 0
    %297 = vmatprep.subr.bf16.mxu0 0
    %298 = vmatpush2.bf16.msra.mxu0 0
    %299 = vmatprep.subr.bf16.mxu0 0
    %300 = vmatpush2.bf16.msra.mxu0 0
    %301 = vmatprep.mubr.bf16.mxu0 0
    %302 = vmatmul.mubr.bf16.gmra.mxu0 %v225
    %v303 = vpop.f32.mrf.mxu0
    %v304 = vadd.f32 %v264, %v303
    %v305 = vpop.f32.mrf.mxu0
    %v306 = vpop.f32.mrf.mxu0
    %v307 = vpop.f32.mrf.mxu0
    %308 = vdwg.mxu0
    %v309 = vmul.f32 %v51, %v52
    %v310 = vpack.c.bf16 %v309, %v309
    %v311 = vunpack.c.l.bf16 %v310
    %v312 = vsub.f32 %v309, %v311
    %v313 = vpack.c.bf16 %v312, %v312
    %314 = vmatprep.subr.bf16.mxu0 0
    %315 = vmatpush1.bf16.msra.mxu0 1065369472
    %316 = vmatprep.subr.bf16.mxu0 0
    %317 = vmatpush1.bf16.msra.mxu0 1065369472
    %318 = vmatprep.subr.bf16.mxu0 0
    %319 = vmatpush1.bf16.msra.mxu0 1065369472
    %320 = vmatprep.subr.bf16.mxu0 0
    %321 = vmatpush1.bf16.msra.mxu0 1065369472
    %322 = vmatprep.subr.bf16.mxu0 0
    %323 = vmatpush1.bf16.msra.mxu0 1065369472
    %324 = vmatprep.subr.bf16.mxu0 0
    %325 = vmatpush1.bf16.msra.mxu0 1065369472
    %326 = vmatprep.subr.bf16.mxu0 0
    %327 = vmatpush1.bf16.msra.mxu0 1065369472
    %328 = vmatprep.subr.bf16.mxu0 0
    %329 = vmatpush1.bf16.msra.mxu0 1065369472
    %330 = vmatprep.subr.bf16.mxu0 0
    %331 = vmatpush2.bf16.msra.mxu0 0
    %332 = vmatprep.subr.bf16.mxu0 0
    %333 = vmatpush2.bf16.msra.mxu0 0
    %334 = vmatprep.subr.bf16.mxu0 0
    %335 = vmatpush2.bf16.msra.mxu0 0
    %336 = vmatprep.subr.bf16.mxu0 0
    %337 = vmatpush2.bf16.msra.mxu0 0
    %338 = vmatprep.subr.bf16.mxu0 0
    %339 = vmatpush2.bf16.msra.mxu0 0
    %340 = vmatprep.subr.bf16.mxu0 0
    %341 = vmatpush2.bf16.msra.mxu0 0
    %342 = vmatprep.subr.bf16.mxu0 0
    %343 = vmatpush2.bf16.msra.mxu0 0
    %344 = vmatprep.subr.bf16.mxu0 0
    %345 = vmatpush2.bf16.msra.mxu0 0
    %346 = vmatprep.mubr.bf16.mxu0 0
    %347 = vmatmul.mubr.bf16.gmra.mxu0 %v313
    %v348 = vpop.f32.mrf.mxu0
    %v349 = vadd.f32 0.0, %v348
    %v350 = vpop.f32.mrf.mxu0
    %v351 = vpop.f32.mrf.mxu0
    %v352 = vpop.f32.mrf.mxu0
    %353 = vdwg.mxu0
    %354 = vmatprep.subr.bf16.mxu0 0
    %355 = vmatpush1.bf16.msra.mxu0 1065369472
    %356 = vmatprep.subr.bf16.mxu0 0
    %357 = vmatpush1.bf16.msra.mxu0 1065369472
    %358 = vmatprep.subr.bf16.mxu0 0
    %359 = vmatpush1.bf16.msra.mxu0 1065369472
    %360 = vmatprep.subr.bf16.mxu0 0
    %361 = vmatpush1.bf16.msra.mxu0 1065369472
    %362 = vmatprep.subr.bf16.mxu0 0
    %363 = vmatpush1.bf16.msra.mxu0 1065369472
    %364 = vmatprep.subr.bf16.mxu0 0
    %365 = vmatpush1.bf16.msra.mxu0 1065369472
    %366 = vmatprep.subr.bf16.mxu0 0
    %367 = vmatpush1.bf16.msra.mxu0 1065369472
    %368 = vmatprep.subr.bf16.mxu0 0
    %369 = vmatpush1.bf16.msra.mxu0 1065369472
    %370 = vmatprep.subr.bf16.mxu0 0
    %371 = vmatpush2.bf16.msra.mxu0 0
    %372 = vmatprep.subr.bf16.mxu0 0
    %373 = vmatpush2.bf16.msra.mxu0 0
    %374 = vmatprep.subr.bf16.mxu0 0
    %375 = vmatpush2.bf16.msra.mxu0 0
    %376 = vmatprep.subr.bf16.mxu0 0
    %377 = vmatpush2.bf16.msra.mxu0 0
    %378 = vmatprep.subr.bf16.mxu0 0
    %379 = vmatpush2.bf16.msra.mxu0 0
    %380 = vmatprep.subr.bf16.mxu0 0
    %381 = vmatpush2.bf16.msra.mxu0 0
    %382 = vmatprep.subr.bf16.mxu0 0
    %383 = vmatpush2.bf16.msra.mxu0 0
    %384 = vmatprep.subr.bf16.mxu0 0
    %385 = vmatpush2.bf16.msra.mxu0 0
    %386 = vmatprep.mubr.bf16.mxu0 0
    %387 = vmatmul.mubr.bf16.gmra.mxu0 %v310
    %v388 = vpop.f32.mrf.mxu0
    %v389 = vadd.f32 %v349, %v388
    %v390 = vpop.f32.mrf.mxu0
    %v391 = vpop.f32.mrf.mxu0
    %v392 = vpop.f32.mrf.mxu0
    %393 = vdwg.mxu0
    %v394 = vmul.f32 %v51, %v53
    %v395 = vpack.c.bf16 %v394, %v394
    %v396 = vunpack.c.l.bf16 %v395
    %v397 = vsub.f32 %v394, %v396
    %v398 = vpack.c.bf16 %v397, %v397
    %399 = vmatprep.subr.bf16.mxu0 0
    %400 = vmatpush1.bf16.msra.mxu0 1065369472
    %401 = vmatprep.subr.bf16.mxu0 0
    %402 = vmatpush1.bf16.msra.mxu0 1065369472
    %403 = vmatprep.subr.bf16.mxu0 0
    %404 = vmatpush1.bf16.msra.mxu0 1065369472
    %405 = vmatprep.subr.bf16.mxu0 0
    %406 = vmatpush1.bf16.msra.mxu0 1065369472
    %407 = vmatprep.subr.bf16.mxu0 0
    %408 = vmatpush1.bf16.msra.mxu0 1065369472
    %409 = vmatprep.subr.bf16.mxu0 0
    %410 = vmatpush1.bf16.msra.mxu0 1065369472
    %411 = vmatprep.subr.bf16.mxu0 0
    %412 = vmatpush1.bf16.msra.mxu0 1065369472
    %413 = vmatprep.subr.bf16.mxu0 0
    %414 = vmatpush1.bf16.msra.mxu0 1065369472
    %415 = vmatprep.subr.bf16.mxu0 0
    %416 = vmatpush2.bf16.msra.mxu0 0
    %417 = vmatprep.subr.bf16.mxu0 0
    %418 = vmatpush2.bf16.msra.mxu0 0
    %419 = vmatprep.subr.bf16.mxu0 0
    %420 = vmatpush2.bf16.msra.mxu0 0
    %421 = vmatprep.subr.bf16.mxu0 0
    %422 = vmatpush2.bf16.msra.mxu0 0
    %423 = vmatprep.subr.bf16.mxu0 0
    %424 = vmatpush2.bf16.msra.mxu0 0
    %425 = vmatprep.subr.bf16.mxu0 0
    %426 = vmatpush2.bf16.msra.mxu0 0
    %427 = vmatprep.subr.bf16.mxu0 0
    %428 = vmatpush2.bf16.msra.mxu0 0
    %429 = vmatprep.subr.bf16.mxu0 0
    %430 = vmatpush2.bf16.msra.mxu0 0
    %431 = vmatprep.mubr.bf16.mxu0 0
    %432 = vmatmul.mubr.bf16.gmra.mxu0 %v398
    %v433 = vpop.f32.mrf.mxu0
    %v434 = vadd.f32 0.0, %v433
    %v435 = vpop.f32.mrf.mxu0
    %v436 = vpop.f32.mrf.mxu0
    %v437 = vpop.f32.mrf.mxu0
    %438 = vdwg.mxu0
    %439 = vmatprep.subr.bf16.mxu0 0
    %440 = vmatpush1.bf16.msra.mxu0 1065369472
    %441 = vmatprep.subr.bf16.mxu0 0
    %442 = vmatpush1.bf16.msra.mxu0 1065369472
    %443 = vmatprep.subr.bf16.mxu0 0
    %444 = vmatpush1.bf16.msra.mxu0 1065369472
    %445 = vmatprep.subr.bf16.mxu0 0
    %446 = vmatpush1.bf16.msra.mxu0 1065369472
    %447 = vmatprep.subr.bf16.mxu0 0
    %448 = vmatpush1.bf16.msra.mxu0 1065369472
    %449 = vmatprep.subr.bf16.mxu0 0
    %450 = vmatpush1.bf16.msra.mxu0 1065369472
    %451 = vmatprep.subr.bf16.mxu0 0
    %452 = vmatpush1.bf16.msra.mxu0 1065369472
    %453 = vmatprep.subr.bf16.mxu0 0
    %454 = vmatpush1.bf16.msra.mxu0 1065369472
    %455 = vmatprep.subr.bf16.mxu0 0
    %456 = vmatpush2.bf16.msra.mxu0 0
    %457 = vmatprep.subr.bf16.mxu0 0
    %458 = vmatpush2.bf16.msra.mxu0 0
    %459 = vmatprep.subr.bf16.mxu0 0
    %460 = vmatpush2.bf16.msra.mxu0 0
    %461 = vmatprep.subr.bf16.mxu0 0
    %462 = vmatpush2.bf16.msra.mxu0 0
    %463 = vmatprep.subr.bf16.mxu0 0
    %464 = vmatpush2.bf16.msra.mxu0 0
    %465 = vmatprep.subr.bf16.mxu0 0
    %466 = vmatpush2.bf16.msra.mxu0 0
    %467 = vmatprep.subr.bf16.mxu0 0
    %468 = vmatpush2.bf16.msra.mxu0 0
    %469 = vmatprep.subr.bf16.mxu0 0
    %470 = vmatpush2.bf16.msra.mxu0 0
    %471 = vmatprep.mubr.bf16.mxu0 0
    %472 = vmatmul.mubr.bf16.gmra.mxu0 %v395
    %v473 = vpop.f32.mrf.mxu0
    %v474 = vadd.f32 %v434, %v473
    %v475 = vpop.f32.mrf.mxu0
    %v476 = vpop.f32.mrf.mxu0
    %v477 = vpop.f32.mrf.mxu0
    %478 = vdwg.mxu0
    %v479 = vmul.f32 %v134, %v219
    %v480 = vmax.f32 %v479, 1e-24
    %v481 = vrsqrt.pop %v480
    %v482 = vmul.f32 %v389, %v481
    %v483 = vmul.f32 %v134, %v304
    %v484 = vmax.f32 %v483, 1e-24
    %v485 = vrsqrt.pop %v484
    %v486 = vmul.f32 %v474, %v485
    %v487 = vsub.f32 %v486, %v482
    %v488 = vmul.f32 %v487, 14.285714
    %v489 = vadd.f32 %v488, 0.5
    %v490 = vmax.f32 %v489, 0.0
    %s491 = smul.u32 0, 8
    %v492 = vlaneseq
    %v493 = vshrl.u32 %v492, 7
    %v494 = vstv %s491
    %v495 = vadd.s32 %v494, %v493
    %vm496 = vcmp.lt.s32.totalorder %v495, 8
    %v497 = vsel %vm496, %v490, 0.0
    %vm498 = vcmask 7168
    %499 = vst.msk [vmem:[%s3] sm:$0xff] %vm498, %v497
    // Predicated region
    $region26: #{contrastive_triplet_loss.1} parent=1 // pred_check
      _
    $region27: #{contrastive_triplet_loss.1} parent=1 // pred_check_branch
      %501 = sbr.rel (0) target = $region29
    $region28: #{contrastive_triplet_loss.1} parent=1 // pred_region
      _
    $region29: #{contrastive_triplet_loss.1} parent=1 // pred_fallthru
      _
    // Predicated region
    $region30: #{contrastive_triplet_loss.1} parent=1 // pred_check
      _
    $region31: #{contrastive_triplet_loss.1} parent=1 // pred_check_branch
      %503 = sbr.rel (0) target = $region33
    $region32: #{contrastive_triplet_loss.1} parent=1 // pred_region
      _
    $region33: #{contrastive_triplet_loss.1} parent=1 // pred_fallthru
      _
    %504 = vsyncpa [#allocation3], 1
    %505 = vsyncpa [#allocation5], 1

</llo_original>
